<compile_context>
chip_gen: v5e
topology: v5e:2x2
jax: 0.10.0
libtpu: 0.0.40
codegen_flags: <defaults>
</compile_context>

<pallas_src>
import jax
import jax.numpy as jnp
from jax.experimental import pallas as pl
from jax.experimental.pallas import tpu as pltpu

A_BIT = 8
QN = 0.0
QP = float(2 ** A_BIT - 1)  # 255 for 8-bit unsigned

_LANES = 128
_TILE_BYTES = 4 * 1024 * 1024       # per-block buffer byte budget (4 MiB)
_SINGLE_BLOCK_BYTES = 512 * 1024    # slabs <= 512 KiB run as a single block
_SCALE_EPS = 1e-12                  # keep s strictly positive (fold validity)


def _qrelu_kernel(s_ref, x_ref, o_ref):
    # s_ref: (1,) f32 in SMEM -> step size s
    # x_ref / o_ref: (block_m, 128) tiles in VMEM (native dtype)
    s = s_ref[0]
    x = x_ref[...].astype(jnp.float32)
    # Divide (not multiply-by-reciprocal) for parity with the PyTorch reference.
    # ReLU is folded into the clip: for s > 0, negative x rounds to <= 0 and is
    # clipped to Qn = 0, identical to relu-then-quantize.
    q = jnp.clip(jnp.round(x / s), QN, QP)
    o_ref[...] = (q * s).astype(o_ref.dtype)


def _launch(xf, sc, donate=False):
    """Run the kernel over a lane-dense (m, 128) slab."""
    m = xf.shape[0]
    dtype = xf.dtype
    itemsize = jnp.dtype(dtype).itemsize
    slab_bytes = m * _LANES * itemsize

    if slab_bytes <= _SINGLE_BLOCK_BYTES:
        # Tiny slab: single block (block == full array dims -> always legal).
        block_m = m
        grid = (1,)
    else:
        # Dtype-aware tile from the byte budget: 8192 rows f32, 16384 rows bf16.
        tile_m = max(16, _TILE_BYTES // (_LANES * itemsize))
        # Force >= 2 grid steps so DMA overlaps compute and (v7x) both
        # TensorCores get work; keep rows a multiple of 16 (bf16-safe sublanes).
        half_m = ((pl.cdiv(m, 2) + 15) // 16) * 16
        block_m = min(tile_m, half_m)
        grid = (pl.cdiv(m, block_m),)

    extra = {}
    if donate:
        # Alias x (input index 1: after the SMEM scalar) to the output. Useful
        # on the PTQ inference path when the pre-activation is dead afterwards.
        extra["input_output_aliases"] = {1: 0}

    return pl.pallas_call(
        _qrelu_kernel,
        out_shape=jax.ShapeDtypeStruct((m, _LANES), dtype),
        grid_spec=pltpu.PrefetchScalarGridSpec(
            num_scalar_prefetch=0,
            grid=grid,
            in_specs=[
                pl.BlockSpec(memory_space=pltpu.MemorySpace.SMEM),   # [s]
                pl.BlockSpec((block_m, _LANES), lambda i: (i, 0)),   # x tile
            ],
            out_specs=pl.BlockSpec((block_m, _LANES), lambda i: (i, 0)),
        ),
        compiler_params=pltpu.CompilerParams(
            dimension_semantics=("parallel",),
            # 32 MiB: raises v5e's 16 MiB default (needed for 4 MiB f32 blocks,
            # 16 MiB double-buffered), matches v6e/v7x defaults, and stays well
            # under v7x's 64 MiB physical VMEM per TensorCore.
            vmem_limit_bytes=32 << 20,
        ),
        **extra,
    )(sc, xf)


def qrelu_forward(x, scale, *, donate_input=False):
    """ReLU + LSQ 8-bit unsigned per-tensor fake-quant.

    x: any-shape array (f32 / bf16), scale: positive scalar step size.
    """
    orig_shape = x.shape
    dtype = x.dtype
    n = x.size

    # Clamp s to a small positive epsilon: keeps the ReLU-fold valid and avoids
    # inf/NaN if a learnable step size ever collapses to 0.
    scale_f32 = jnp.maximum(jnp.asarray(scale, jnp.float32).reshape(()),
                            jnp.float32(_SCALE_EPS))
    sc = scale_f32.reshape(1)  # (1,) f32 -> SMEM

    if n % _LANES == 0:
        # Fast path: view-only reshape to a lane-dense slab and back.
        xf = x.reshape(n // _LANES, _LANES)
        out = _launch(xf, sc, donate=donate_input)
        return out.reshape(orig_shape)

    # Ragged fallback: kernel on the 128-aligned prefix, plain-JAX on the
    # < 128-element tail. No padding / scatter / extra full HBM passes.
    x_flat = x.reshape(-1)
    n_main = (n // _LANES) * _LANES
    parts = []
    if n_main > 0:
        main = _launch(x_flat[:n_main].reshape(n_main // _LANES, _LANES), sc)
        parts.append(main.reshape(-1))
    tail = x_flat[n_main:]
    if tail.size > 0:
        tq = jnp.clip(jnp.round(tail.astype(jnp.float32) / scale_f32), QN, QP)
        parts.append((tq * scale_f32).astype(dtype))
    out = parts[0] if len(parts) == 1 else jnp.concatenate(parts)
    return out.reshape(orig_shape)


def init_ptq_scale(x):
    """Deterministic LSQ-style PTQ init of the step size (glue, plain JAX):
    s = 2 * mean(|relu(x)|) / sqrt(Qp)."""
    y = jnp.maximum(x.astype(jnp.float32), 0.0)
    return 2.0 * jnp.mean(jnp.abs(y)) / jnp.sqrt(QP)


def qrelu_reference(x, scale):
    y = jnp.maximum(x.astype(jnp.float32), 0.0)
    q = jnp.clip(jnp.round(y / scale), QN, QP)
    return (q * scale).astype(x.dtype)


# TODO(synk): LSQ backward (gradient STE w.r.t. the learnable step size) is not
# implemented; only the forward fake-quant pass is kernelized.

if __name__ == "__main__":
    key = jax.random.PRNGKey(0)

    # 1) NCHW conv activation (fast path, single-block launch).
    x = jax.random.normal(key, (2, 4, 16, 16), dtype=jnp.float32)
    scale = init_ptq_scale(x)
    out = jax.block_until_ready(qrelu_forward(x, scale))
    ref = qrelu_reference(x, scale)
    assert out.shape == x.shape and out.dtype == x.dtype
    assert jnp.max(jnp.abs(out - ref)) < 1e-5

    # 2) Medium activation (exercises the multi-step pipelined grid).
    x1 = jax.random.normal(jax.random.PRNGKey(2), (8, 64, 32, 32), dtype=jnp.float32)
    scale1 = init_ptq_scale(x1)
    out1 = jax.block_until_ready(qrelu_forward(x1, scale1))
    ref1 = qrelu_reference(x1, scale1)
    assert out1.shape == x1.shape and out1.dtype == x1.dtype
    assert jnp.max(jnp.abs(out1 - ref1)) < 1e-5

    # 3) Ragged shape (numel % 128 != 0): 128-aligned prefix + plain-JAX tail.
    x2 = jax.random.normal(jax.random.PRNGKey(1), (3, 5, 70), dtype=jnp.float32)
    scale2 = init_ptq_scale(x2)
    out2 = jax.block_until_ready(qrelu_forward(x2, scale2))
    ref2 = qrelu_reference(x2, scale2)
    assert out2.shape == x2.shape and out2.dtype == x2.dtype
    assert jnp.max(jnp.abs(out2 - ref2)) < 1e-5

    # 4) bf16 I/O path (halved HBM traffic, dtype-aware tile sizing).
    x3 = jax.random.normal(jax.random.PRNGKey(3), (2, 8, 16, 16), dtype=jnp.bfloat16)
    scale3 = init_ptq_scale(x3)
    out3 = jax.block_until_ready(qrelu_forward(x3, scale3))
    ref3 = qrelu_reference(x3, scale3)
    assert out3.shape == x3.shape and out3.dtype == x3.dtype
    assert jnp.max(jnp.abs(out3.astype(jnp.float32) - ref3.astype(jnp.float32))) < 1e-2

    print("KERNEL_OK")
</pallas_src>

<mosaic_0001>
module attributes {stable_mosaic.version = 11 : i64} {
  func.func @_qrelu_kernel(%arg0: i32, %arg1: memref<1xf32, #tpu.memory_space<smem>>, %arg2: memref<16x128xf32, #tpu.memory_space<vmem>>, %arg3: memref<16x128xf32, #tpu.memory_space<vmem>>) attributes {dimension_semantics = [#tpu.dimension_semantics<parallel>], iteration_bounds = array<i64: 1>, scalar_prefetch = 0 : i64, scratch_operands = 0 : i64, tpu.core_type = #tpu.core_type<tc>, window_params = [{transform_indices = @transform_0, window_bounds = array<i64: 1>}, {transform_indices = @transform_1, window_bounds = array<i64: 16, 128>}, {transform_indices = @transform_2, window_bounds = array<i64: 16, 128>}]} {
    %c0 = arith.constant 0 : index
    %0 = memref.load %arg1[%c0] : memref<1xf32, #tpu.memory_space<smem>>
    %c0_0 = arith.constant 0 : index
    %c0_1 = arith.constant 0 : index
    %1 = vector.load %arg2[%c0_0, %c0_1] : memref<16x128xf32, #tpu.memory_space<vmem>>, vector<16x128xf32>
    %2 = vector.broadcast %0 : f32 to vector<16x128xf32>
    %3 = arith.divf %1, %2 : vector<16x128xf32>
    %4 = math.roundeven %3 : vector<16x128xf32>
    %cst = arith.constant 0.000000e+00 : f32
    %cst_2 = arith.constant 2.550000e+02 : f32
    %5 = vector.broadcast %cst : f32 to vector<16x128xf32>
    %6 = arith.maximumf %5, %4 : vector<16x128xf32>
    %7 = vector.broadcast %cst_2 : f32 to vector<16x128xf32>
    %8 = arith.minimumf %7, %6 : vector<16x128xf32>
    %9 = vector.broadcast %0 : f32 to vector<16x128xf32>
    %10 = arith.mulf %8, %9 : vector<16x128xf32>
    %c0_3 = arith.constant 0 : index
    %c0_4 = arith.constant 0 : index
    %11 = vector.load %arg3[%c0_3, %c0_4] : memref<16x128xf32, #tpu.memory_space<vmem>>, vector<16x128xf32>
    tpu.vector_store %arg3[%c0_3, %c0_4], %10 {strides = array<i32>} : memref<16x128xf32, #tpu.memory_space<vmem>>, vector<16x128xf32>,
    return
  }
  func.func @transform_0(%arg0: i32) -> i32 {
    %c0_i32 = arith.constant 0 : i32
    %c0_i32_0 = arith.constant 0 : i32
    return %c0_i32 : i32
  }
  func.func @transform_1(%arg0: i32) -> (i32, i32) {
    %c0_i32 = arith.constant 0 : i32
    %c0_i32_0 = arith.constant 0 : i32
    return %arg0, %c0_i32 : i32, i32
  }
  func.func @transform_2(%arg0: i32) -> (i32, i32) {
    %c0_i32 = arith.constant 0 : i32
    %c0_i32_0 = arith.constant 0 : i32
    return %arg0, %c0_i32 : i32, i32
  }
}

</mosaic_0001>

<llo_original>
// kernel: tpu_custom_call.1
$region0: #{tpu_custom_call.1}
  #allocation0 [shape = 'u32[]', space=smem, size = 0x4, offset = 0x4, fixed_abs, tag = 'smem constant byte address 0x4 - core index']
  #allocation1 [shape = 'u32[72,128]{1,0:T(1,128)}', space=vmem, size = 0x9000, scoped, tag = 'internal scratch']
  #allocation2 [shape = 'f32[1]{0:T(128)S(6)}', space=smem, size = 0x200, scoped, tag = 'scoped memory for tpu_custom_call.1']
  %s0 = inlined_call_operand.<no memory space> [shape: f32[1], index: 0, kind: input, shape index: {}]
  %s1 = inlined_call_operand.hbm [shape: f32[16,128], index: 1, kind: input, shape index: {}]
  %s2 = inlined_call_operand.hbm [shape: f32[16,128], index: 2, kind: output, shape index: {}]
  %s3 = sld [smem:[#allocation0]]
  $region22: #{tpu_custom_call.1} parent=0
    _
  %s5 = ssub.s32 1, %s3
  %s6 = scalar_select 0, %s5, %s3
  %7 = sst [smem:[#allocation2]] %s0
  $region1: #{tpu_custom_call.1} parent=0
    #allocation3 [shape = 'u8[8192]{0}', space=vmem, size = 0x2000, scoped, tag = 'input window, operand 1, single buffered']
    #allocation4 [shape = 's32[1]{0}', space=sflag, size = 0x4, scoped, tag = 'scoped memory for tpu_custom_call.1']
    #allocation5 [shape = 's32[1]{0}', space=sflag, size = 0x4, scoped, tag = 'scoped memory for tpu_custom_call.1']
    #allocation6 [shape = 'u8[8192]{0}', space=vmem, size = 0x2000, scoped, tag = 'output window, operand 0, single buffered']
    %8 = vsyncpa [#allocation4], 0
    %9 = vsyncpa [#allocation5], 0
    // Predicated region
    $region2: #{tpu_custom_call.1} parent=1 // pred_check
      _
    $region3: #{tpu_custom_call.1} parent=1 // pred_check_branch
      %11 = sbr.rel (0) target = $region5
    $region4: #{tpu_custom_call.1} parent=1 // pred_region
      _
    $region5: #{tpu_custom_call.1} parent=1 // pred_fallthru
      _
    // Predicated region
    $region6: #{tpu_custom_call.1} parent=1 // pred_check
      _
    $region7: #{tpu_custom_call.1} parent=1 // pred_check_branch
      %13 = sbr.rel (0) target = $region9
    $region8: #{tpu_custom_call.1} parent=1 // pred_region
      %15 = vsyncadd [#allocation4], 0
      %s16 = sshll.u32 %s1, 4
      %s17 = int_to_ptr.hbm [resolvable:$true] %s16
      %s18 = sshll.u32 [#allocation3], 4
      %s19 = int_to_ptr.vmem [resolvable:$true] %s18
      %24 = dma.hbm_to_vmem [thread:$0]  %s17, 256, %s19, [#allocation4], 128, 128, 8
    $region9: #{tpu_custom_call.1} parent=1 // pred_fallthru
      _
    // Predicated region
    $region10: #{tpu_custom_call.1} parent=1 // pred_check
      _
    $region11: #{tpu_custom_call.1} parent=1 // pred_check_branch
      %26 = sbr.rel (0) target = $region13
    $region12: #{tpu_custom_call.1} parent=1 // pred_region
      %28 = dma.done [#allocation4], 256
    $region13: #{tpu_custom_call.1} parent=1 // pred_fallthru
      _
    %s29 = sld [smem:[#allocation2]]
    %v30 = vld [vmem:[#allocation3] sm:$0xff]
    %v31 = vld [vmem:[#allocation3 + $0x8] sm:$0xff]
    %v32 = vstv %s29
    %v33 = vrcp.pop %v32
    %v34 = vmul.f32 %v32, %v33
    %v35 = vsub.f32 1.0, %v34
    %v36 = vmul.f32 %v33, %v35
    %v37 = vadd.f32 %v33, %v36
    %vm38 = vweird.f32 %v32
    %vm39 = vweird.f32 %v33
    %vm40 = vmor %vm38, %vm39
    %v41 = vsel %vm40, %v33, %v37
    %v42 = vand.u32 2147483647, %v32
    %vm43 = vcmp.eq.f32.partialorder %v42, 8.507059e+37
    %v44 = vand.u32 %v32, 2147483648
    %v45 = vor.u32 1.1754944e-38, %v44
    %v46 = vsel %vm43, %v45, %v41
    %v47 = vmul.f32 %v30, %v46
    %v48 = vmul.f32 %v31, %v46
    %v49 = vround.ne.pseudo %v47
    %v50 = vround.ne.pseudo %v48
    %v51 = vmax.f32 %v49, 0.0
    %v52 = vmax.f32 %v50, 0.0
    %v53 = vmin.f32 %v51, 255.0
    %v54 = vmin.f32 %v52, 255.0
    %v55 = vmul.f32 %v53, %v32
    %v56 = vmul.f32 %v54, %v32
    %57 = vst [vmem:[#allocation6] sm:$0xff] %v55
    %58 = vst [vmem:[#allocation6 + $0x8] sm:$0xff] %v56
    // Predicated region
    $region14: #{tpu_custom_call.1} parent=1 // pred_check
      _
    $region15: #{tpu_custom_call.1} parent=1 // pred_check_branch
      %60 = sbr.rel (0) target = $region17
    $region16: #{tpu_custom_call.1} parent=1 // pred_region
      %62 = vsyncadd [#allocation5], 0
      %s63 = sshll.u32 [#allocation6], 4
      %s64 = int_to_ptr.vmem [resolvable:$true] %s63
      %s65 = sshll.u32 %s2, 4
      %s66 = int_to_ptr.hbm [resolvable:$true] %s65
      %71 = dma.vmem_to_hbm [thread:$0]  %s64, 256, %s66, [#allocation5], 128, 128, 8
    $region17: #{tpu_custom_call.1} parent=1 // pred_fallthru
      _
    // Predicated region
    $region18: #{tpu_custom_call.1} parent=1 // pred_check
      _
    $region19: #{tpu_custom_call.1} parent=1 // pred_check_branch
      %73 = sbr.rel (0) target = $region21
    $region20: #{tpu_custom_call.1} parent=1 // pred_region
      %75 = dma.done [#allocation5], 256
    $region21: #{tpu_custom_call.1} parent=1 // pred_fallthru
      _
    %76 = vsyncpa [#allocation4], 1
    %77 = vsyncpa [#allocation5], 1

</llo_original>
